<compile_context>
chip_gen: v6e
topology: v6e:2x2x1
jax: 0.10.0
libtpu: 0.0.40
codegen_flags: <defaults>
</compile_context>

<pallas_src>
import jax
import jax.numpy as jnp
from jax.experimental import pallas as pl
from jax.experimental.pallas import tpu as pltpu


def _round_up(x, m):
    return ((x + m - 1) // m) * m


def _patch_embed_kernel(x_ref, w_ref, b_ref, o_ref):
    # (tm, K) bf16 @ (K, Np) bf16 -> f32 accumulate on the MXU, bias in f32.
    acc = jnp.dot(x_ref[...], w_ref[...], preferred_element_type=jnp.float32)
    o_ref[...] = (acc + b_ref[...]).astype(o_ref.dtype)


def patch_embed_forward(x, weight, bias, patch_size, *, tm=256,
                        compute_dtype=jnp.bfloat16):
    """PatchEmbed forward.

    x: (B, C, H, W) float32, weight: (E, C, p, p), bias: (E,).
    Returns (B, num_patches, E) float32 -- identical semantics to
    Conv2d(stride=patch) followed by flatten(2).transpose(1, 2)
    (norm_layer=None -> nn.Identity()).
    """
    B, C, H, W = x.shape
    E = weight.shape[0]
    p = patch_size
    assert H % p == 0 and W % p == 0
    GH, GW = H // p, W // p
    num_patches = GH * GW

    # ---- layout glue (plain JAX): patches flattened in (c, kh, kw) order ----
    # (B, C, GH, p, GW, p) -> (B, GH, GW, C, p, p) -> (B*num_patches, C*p*p)
    # TODO(synk): this transpose materializes X in HBM once; fusing it into the
    # Pallas input DMA (CompilerParams.allow_input_fusion) would remove that
    # pass but is left off to keep compilation robust.
    xp = x.reshape(B, C, GH, p, GW, p).transpose(0, 2, 4, 1, 3, 5)
    X = xp.reshape(B * num_patches, C * p * p)
    Wt = weight.reshape(E, C * p * p).T                       # (K, E)

    M, K = X.shape

    # ---- pad to MXU / vreg friendly shapes ----------------------------------
    # Large M tile for MXU row occupancy; cap at round_up(M, 128) so tiny
    # inputs do not allocate oversized tiles.  N padded to a multiple of 128
    # so output stores are lane-dense.
    tm_eff = min(tm, _round_up(M, 128))
    M_pad = _round_up(M, tm_eff)
    N_pad = _round_up(E, 128)

    X = jnp.pad(X, ((0, M_pad - M), (0, 0))).astype(compute_dtype)
    Wt = jnp.pad(Wt, ((0, 0), (0, N_pad - E))).astype(compute_dtype)
    b2 = jnp.pad(bias, (0, N_pad - E)).reshape(1, N_pad).astype(jnp.float32)

    grid = (M_pad // tm_eff,)
    in_bytes = jnp.dtype(compute_dtype).itemsize
    cost = pl.CostEstimate(
        flops=2 * M_pad * K * N_pad,
        transcendentals=0,
        bytes_accessed=(M_pad * K + K * N_pad) * in_bytes
        + (M_pad * N_pad + N_pad) * 4,
    )

    out = pl.pallas_call(
        _patch_embed_kernel,
        out_shape=jax.ShapeDtypeStruct((M_pad, N_pad), jnp.float32),
        grid_spec=pltpu.PrefetchScalarGridSpec(
            num_scalar_prefetch=0,
            grid=grid,
            in_specs=[
                pl.BlockSpec((tm_eff, K), lambda i: (i, 0)),    # X tile
                pl.BlockSpec((K, N_pad), lambda i: (0, 0)),     # weight, resident
                pl.BlockSpec((1, N_pad), lambda i: (0, 0)),     # bias, resident
            ],
            out_specs=pl.BlockSpec((tm_eff, N_pad), lambda i: (i, 0)),
        ),
        compiler_params=pltpu.CompilerParams(
            dimension_semantics=("parallel",)),
        cost_estimate=cost,
    )(X, Wt, b2)

    # Strip padding; already in (B, num_patches, E) order after reshape.
    return out[:M, :E].reshape(B, num_patches, E).astype(x.dtype)


if __name__ == "__main__":
    # Small, module-consistent shapes: img_size=16, patch_size=4, in_chans=4, embed_dim=32
    B, C, Himg, Wimg = 2, 4, 16, 16
    P, EMBED = 4, 32

    key = jax.random.PRNGKey(0)
    kx, kw, kb = jax.random.split(key, 3)
    x = jax.random.normal(kx, (B, C, Himg, Wimg), dtype=jnp.float32)
    # Deterministic synthetic parameters (Conv2d(in_chans, embed_dim, P, stride=P))
    weight = jax.random.normal(kw, (EMBED, C, P, P), dtype=jnp.float32) * 0.02
    bias = jax.random.normal(kb, (EMBED,), dtype=jnp.float32) * 0.02

    out = patch_embed_forward(x, weight, bias, P)
    out = jax.block_until_ready(out)
    assert out.shape == (B, (Himg // P) * (Wimg // P), EMBED)

    # 1) Exact-math check against a bf16-consistent plain-JAX matmul (tight tol).
    GH, GW = Himg // P, Wimg // P
    Xr = x.reshape(B, C, GH, P, GW, P).transpose(0, 2, 4, 1, 3, 5)
    Xr = Xr.reshape(B * GH * GW, C * P * P)
    Wr = weight.reshape(EMBED, C * P * P).T
    ref_mm = jnp.dot(Xr.astype(jnp.bfloat16).astype(jnp.float32),
                     Wr.astype(jnp.bfloat16).astype(jnp.float32),
                     preferred_element_type=jnp.float32) + bias
    ref_mm = ref_mm.reshape(B, GH * GW, EMBED)
    assert jnp.allclose(out, ref_mm, atol=1e-4, rtol=1e-4)

    # 2) Semantic check against the f32 conv reference (looser: bf16 operands).
    ref = jax.lax.conv_general_dilated(
        x, weight, window_strides=(P, P), padding="VALID",
        dimension_numbers=("NCHW", "OIHW", "NCHW"))
    ref = ref + bias.reshape(1, EMBED, 1, 1)
    ref = ref.reshape(B, EMBED, -1).transpose(0, 2, 1)
    assert jnp.allclose(out, ref, atol=2e-2, rtol=2e-2)

    print("KERNEL_OK")
</pallas_src>

<mosaic_0001>
module attributes {stable_mosaic.version = 11 : i64} {
  func.func @_patch_embed_kernel(%arg0: i32, %arg1: memref<128x64xbf16, #tpu.memory_space<vmem>>, %arg2: memref<64x128xbf16, #tpu.memory_space<vmem>>, %arg3: memref<1x128xf32, #tpu.memory_space<vmem>>, %arg4: memref<128x128xf32, #tpu.memory_space<vmem>>) attributes {dimension_semantics = [#tpu.dimension_semantics<parallel>], iteration_bounds = array<i64: 1>, scalar_prefetch = 0 : i64, scratch_operands = 0 : i64, tpu.core_type = #tpu.core_type<tc>, window_params = [{transform_indices = @transform_0, window_bounds = array<i64: 128, 64>}, {pipeline_mode = #tpu.pipeline_mode<synchronous>, transform_indices = @transform_1, window_bounds = array<i64: 64, 128>}, {pipeline_mode = #tpu.pipeline_mode<synchronous>, transform_indices = @transform_2, window_bounds = array<i64: 1, 128>}, {transform_indices = @transform_3, window_bounds = array<i64: 128, 128>}]} {
    %c0 = arith.constant 0 : index
    %c0_0 = arith.constant 0 : index
    %0 = vector.load %arg1[%c0, %c0_0] : memref<128x64xbf16, #tpu.memory_space<vmem>>, vector<128x64xbf16>
    %c0_1 = arith.constant 0 : index
    %c0_2 = arith.constant 0 : index
    %1 = vector.load %arg2[%c0_1, %c0_2] : memref<64x128xbf16, #tpu.memory_space<vmem>>, vector<64x128xbf16>
    %cst = arith.constant dense<0.000000e+00> : vector<128x128xf32>
    %2 = tpu.matmul %0, %1, %cst {dimension_numbers = #tpu.dot_dimension_numbers<[1], [0], [0], [1], [0, 0, 1, 1], [], []>} : vector<128x64xbf16>, vector<64x128xbf16>, vector<128x128xf32> -> vector<128x128xf32>
    %c0_3 = arith.constant 0 : index
    %c0_4 = arith.constant 0 : index
    %3 = vector.load %arg3[%c0_3, %c0_4] : memref<1x128xf32, #tpu.memory_space<vmem>>, vector<1x128xf32>
    %4 = vector.broadcast %3 : vector<1x128xf32> to vector<128x128xf32>
    %5 = arith.addf %2, %4 : vector<128x128xf32>
    %c0_5 = arith.constant 0 : index
    %c0_6 = arith.constant 0 : index
    %6 = vector.load %arg4[%c0_5, %c0_6] : memref<128x128xf32, #tpu.memory_space<vmem>>, vector<128x128xf32>
    tpu.vector_store %arg4[%c0_5, %c0_6], %5 {strides = array<i32>} : memref<128x128xf32, #tpu.memory_space<vmem>>, vector<128x128xf32>,
    return
  }
  func.func @transform_0(%arg0: i32) -> (i32, i32) {
    %c0_i32 = arith.constant 0 : i32
    %c0_i32_0 = arith.constant 0 : i32
    return %arg0, %c0_i32 : i32, i32
  }
  func.func @transform_1(%arg0: i32) -> (i32, i32) {
    %c0_i32 = arith.constant 0 : i32
    %c0_i32_0 = arith.constant 0 : i32
    %c0_i32_1 = arith.constant 0 : i32
    return %c0_i32, %c0_i32_0 : i32, i32
  }
  func.func @transform_2(%arg0: i32) -> (i32, i32) {
    %c0_i32 = arith.constant 0 : i32
    %c0_i32_0 = arith.constant 0 : i32
    %c0_i32_1 = arith.constant 0 : i32
    return %c0_i32, %c0_i32_0 : i32, i32
  }
  func.func @transform_3(%arg0: i32) -> (i32, i32) {
    %c0_i32 = arith.constant 0 : i32
    %c0_i32_0 = arith.constant 0 : i32
    return %arg0, %c0_i32 : i32, i32
  }
}

</mosaic_0001>

<llo_original>
// kernel: tpu_custom_call.1
$region0: #{tpu_custom_call.1}
  #allocation0 [shape = 'u32[]', space=smem, size = 0x4, offset = 0x4, fixed_abs, tag = 'smem constant byte address 0x4 - core index']
  #allocation1 [shape = 'u32[144,128]{1,0:T(1,128)}', space=vmem, size = 0x12000, scoped, tag = 'internal scratch']
  %s0 = inlined_call_operand.vmem [shape: bf16[128,64], index: 0, kind: input, shape index: {}]
  %s1 = inlined_call_operand.vmem [shape: bf16[64,128], index: 1, kind: input, shape index: {}]
  %s2 = inlined_call_operand.vmem [shape: f32[1,128], index: 2, kind: input, shape index: {}]
  %s3 = inlined_call_operand.hbm [shape: f32[128,128], index: 3, kind: output, shape index: {}]
  %s4 = sld [smem:[#allocation0]]
  $region22: #{tpu_custom_call.1} parent=0
    _
  %s6 = ssub.s32 1, %s4
  %s7 = scalar_select 0, %s6, %s4
  $region1: #{tpu_custom_call.1} parent=0
    #allocation2 [shape = 'u8[65536]{0}', space=vmem, size = 0x10000, scoped, tag = 'output window, operand 0, single buffered']
    #allocation3 [shape = 's32[1]{0}', space=sflag, size = 0x4, scoped, tag = 'scoped memory for tpu_custom_call.1']
    %8 = vsyncpa [#allocation3], 0
    // Predicated region
    $region2: #{tpu_custom_call.1} parent=1 // pred_check
      _
    $region3: #{tpu_custom_call.1} parent=1 // pred_check_branch
      %10 = sbr.rel (0) target = $region5
    $region4: #{tpu_custom_call.1} parent=1 // pred_region
      _
    $region5: #{tpu_custom_call.1} parent=1 // pred_fallthru
      _
    // Predicated region
    $region6: #{tpu_custom_call.1} parent=1 // pred_check
      _
    $region7: #{tpu_custom_call.1} parent=1 // pred_check_branch
      %12 = sbr.rel (0) target = $region9
    $region8: #{tpu_custom_call.1} parent=1 // pred_region
      _
    $region9: #{tpu_custom_call.1} parent=1 // pred_fallthru
      _
    // Predicated region
    $region10: #{tpu_custom_call.1} parent=1 // pred_check
      _
    $region11: #{tpu_custom_call.1} parent=1 // pred_check_branch
      %14 = sbr.rel (0) target = $region13
    $region12: #{tpu_custom_call.1} parent=1 // pred_region
      _
    $region13: #{tpu_custom_call.1} parent=1 // pred_fallthru
      _
    %v16 = vld [vmem:[%s0] sm:$0xf]
    %v17 = vld [vmem:[%s0 + $0x4] sm:$0xf]
    %v18 = vld [vmem:[%s0 + $0x8] sm:$0xf]
    %v19 = vld [vmem:[%s0 + $0xc] sm:$0xf]
    %v20 = vld [vmem:[%s0 + $0x10] sm:$0xf]
    %v21 = vld [vmem:[%s0 + $0x14] sm:$0xf]
    %v22 = vld [vmem:[%s0 + $0x18] sm:$0xf]
    %v23 = vld [vmem:[%s0 + $0x1c] sm:$0xf]
    %v24 = vld [vmem:[%s0 + $0x20] sm:$0xf]
    %v25 = vld [vmem:[%s0 + $0x24] sm:$0xf]
    %v26 = vld [vmem:[%s0 + $0x28] sm:$0xf]
    %v27 = vld [vmem:[%s0 + $0x2c] sm:$0xf]
    %v28 = vld [vmem:[%s0 + $0x30] sm:$0xf]
    %v29 = vld [vmem:[%s0 + $0x34] sm:$0xf]
    %v30 = vld [vmem:[%s0 + $0x38] sm:$0xf]
    %v31 = vld [vmem:[%s0 + $0x3c] sm:$0xf]
    %v32 = vld [vmem:[%s1] sm:$0xf]
    %v33 = vld [vmem:[%s1 + $0x4] sm:$0xf]
    %v34 = vld [vmem:[%s1 + $0x8] sm:$0xf]
    %v35 = vld [vmem:[%s1 + $0xc] sm:$0xf]
    %v36 = vld [vmem:[%s1 + $0x10] sm:$0xf]
    %v37 = vld [vmem:[%s1 + $0x14] sm:$0xf]
    %v38 = vld [vmem:[%s1 + $0x18] sm:$0xf]
    %v39 = vld [vmem:[%s1 + $0x1c] sm:$0xf]
    %v40 = vld [vmem:[%s2] sm:$0x1]
    %v42 = vlaneseq
    %v43 = vshrl.u32 %v42, 7
    %v44 = vsub.s32 0, %v43
    %v45 = vrot.slane %v40, %v44
    %v63 = vunpack.c.l.b16 %v16
    %v64 = vunpack.c.l.b16 %v17
    %v65 = vunpack.c.l.b16 %v18
    %v66 = vunpack.c.l.b16 %v19
    %v67 = vunpack.c.l.b16 %v20
    %v68 = vunpack.c.l.b16 %v21
    %v69 = vunpack.c.l.b16 %v22
    %v70 = vunpack.c.l.b16 %v23
    %v71 = vunpack.c.l.b16 %v24
    %v72 = vunpack.c.l.b16 %v25
    %v73 = vunpack.c.l.b16 %v26
    %v74 = vunpack.c.l.b16 %v27
    %v75 = vunpack.c.l.b16 %v28
    %v76 = vunpack.c.l.b16 %v29
    %v77 = vunpack.c.l.b16 %v30
    %v78 = vunpack.c.l.b16 %v31
    %v79 = vpack.c.b16 %v64, %v63
    %v80 = vpack.c.b16 %v66, %v65
    %v81 = vpack.c.b16 %v68, %v67
    %v82 = vpack.c.b16 %v70, %v69
    %v83 = vpack.c.b16 %v72, %v71
    %v84 = vpack.c.b16 %v74, %v73
    %v85 = vpack.c.b16 %v76, %v75
    %v86 = vpack.c.b16 %v78, %v77
    %v95 = vunpack.c.l.b16 %v32
    %v96 = vunpack.c.l.b16 %v33
    %v97 = vunpack.c.l.b16 %v34
    %v98 = vunpack.c.l.b16 %v35
    %v99 = vunpack.c.l.b16 %v36
    %v100 = vunpack.c.l.b16 %v37
    %v101 = vunpack.c.l.b16 %v38
    %v102 = vunpack.c.l.b16 %v39
    %v103 = vpack.c.b16 %v96, %v95
    %v104 = vpack.c.b16 %v98, %v97
    %v105 = vpack.c.b16 %v100, %v99
    %v106 = vpack.c.b16 %v102, %v101
    %vm111 = vcmask 523264
    %v113 = vsel %vm111, %v79, 0
    %v116 = vsel %vm111, %v80, 0
    %v119 = vsel %vm111, %v81, 0
    %v122 = vsel %vm111, %v82, 0
    %v125 = vsel %vm111, %v83, 0
    %v128 = vsel %vm111, %v84, 0
    %v131 = vsel %vm111, %v85, 0
    %v134 = vsel %vm111, %v86, 0
    %136 = vmatprep.subr.bf16.mxu0 0
    %137 = vmatpush1.bf16.msra.mxu0 0
    %138 = vmatprep.subr.bf16.mxu0 0
    %139 = vmatpush1.bf16.msra.mxu0 0
    %140 = vmatprep.subr.bf16.mxu0 0
    %141 = vmatpush1.bf16.msra.mxu0 0
    %142 = vmatprep.subr.bf16.mxu0 0
    %143 = vmatpush1.bf16.msra.mxu0 0
    %144 = vmatprep.subr.bf16.mxu0 0
    %145 = vmatpush1.bf16.msra.mxu0 %v106
    %146 = vmatprep.subr.bf16.mxu0 0
    %147 = vmatpush1.bf16.msra.mxu0 %v105
    %148 = vmatprep.subr.bf16.mxu0 0
    %149 = vmatpush1.bf16.msra.mxu0 %v104
    %150 = vmatprep.subr.bf16.mxu0 0
    %151 = vmatpush1.bf16.msra.mxu0 %v103
    %152 = vmatprep.subr.bf16.mxu0 0
    %153 = vmatpush2.bf16.msra.mxu0 0
    %154 = vmatprep.subr.bf16.mxu0 0
    %155 = vmatpush2.bf16.msra.mxu0 0
    %156 = vmatprep.subr.bf16.mxu0 0
    %157 = vmatpush2.bf16.msra.mxu0 0
    %158 = vmatprep.subr.bf16.mxu0 0
    %159 = vmatpush2.bf16.msra.mxu0 0
    %160 = vmatprep.subr.bf16.mxu0 0
    %161 = vmatpush2.bf16.msra.mxu0 0
    %162 = vmatprep.subr.bf16.mxu0 0
    %163 = vmatpush2.bf16.msra.mxu0 0
    %164 = vmatprep.subr.bf16.mxu0 0
    %165 = vmatpush2.bf16.msra.mxu0 0
    %166 = vmatprep.subr.bf16.mxu0 0
    %167 = vmatpush2.bf16.msra.mxu0 0
    %168 = vmatprep.mubr.bf16.mxu0 0
    %169 = vmatmul.mubr.bf16.gmra.mxu0 %v113
    %v170 = vpop.f32.mrf.mxu0
    %v171 = vadd.f32 %v45, %v170
    %v172 = vpop.f32.mrf.mxu0
    %v173 = vpop.f32.mrf.mxu0
    %v174 = vadd.f32 %v45, %v173
    %v175 = vpop.f32.mrf.mxu0
    %176 = vmatprep.mubr.bf16.mxu0 0
    %177 = vmatmul.mubr.bf16.gmra.mxu0 %v116
    %v178 = vpop.f32.mrf.mxu0
    %v179 = vadd.f32 %v45, %v178
    %v180 = vpop.f32.mrf.mxu0
    %v181 = vpop.f32.mrf.mxu0
    %v182 = vadd.f32 %v45, %v181
    %v183 = vpop.f32.mrf.mxu0
    %184 = vmatprep.mubr.bf16.mxu0 0
    %185 = vmatmul.mubr.bf16.gmra.mxu0 %v119
    %v186 = vpop.f32.mrf.mxu0
    %v187 = vadd.f32 %v45, %v186
    %v188 = vpop.f32.mrf.mxu0
    %v189 = vpop.f32.mrf.mxu0
    %v190 = vadd.f32 %v45, %v189
    %v191 = vpop.f32.mrf.mxu0
    %192 = vmatprep.mubr.bf16.mxu0 0
    %193 = vmatmul.mubr.bf16.gmra.mxu0 %v122
    %v194 = vpop.f32.mrf.mxu0
    %v195 = vadd.f32 %v45, %v194
    %v196 = vpop.f32.mrf.mxu0
    %v197 = vpop.f32.mrf.mxu0
    %v198 = vadd.f32 %v45, %v197
    %v199 = vpop.f32.mrf.mxu0
    %200 = vmatprep.mubr.bf16.mxu0 0
    %201 = vmatmul.mubr.bf16.gmra.mxu0 %v125
    %v202 = vpop.f32.mrf.mxu0
    %v203 = vadd.f32 %v45, %v202
    %v204 = vpop.f32.mrf.mxu0
    %v205 = vpop.f32.mrf.mxu0
    %v206 = vadd.f32 %v45, %v205
    %v207 = vpop.f32.mrf.mxu0
    %208 = vmatprep.mubr.bf16.mxu0 0
    %209 = vmatmul.mubr.bf16.gmra.mxu0 %v128
    %v210 = vpop.f32.mrf.mxu0
    %v211 = vadd.f32 %v45, %v210
    %v212 = vpop.f32.mrf.mxu0
    %v213 = vpop.f32.mrf.mxu0
    %v214 = vadd.f32 %v45, %v213
    %v215 = vpop.f32.mrf.mxu0
    %216 = vmatprep.mubr.bf16.mxu0 0
    %217 = vmatmul.mubr.bf16.gmra.mxu0 %v131
    %v218 = vpop.f32.mrf.mxu0
    %v219 = vadd.f32 %v45, %v218
    %v220 = vpop.f32.mrf.mxu0
    %v221 = vpop.f32.mrf.mxu0
    %v222 = vadd.f32 %v45, %v221
    %v223 = vpop.f32.mrf.mxu0
    %224 = vmatprep.mubr.bf16.mxu0 0
    %225 = vmatmul.mubr.bf16.gmra.mxu0 %v134
    %v226 = vpop.f32.mrf.mxu0
    %v227 = vadd.f32 %v45, %v226
    %v228 = vpop.f32.mrf.mxu0
    %v229 = vpop.f32.mrf.mxu0
    %v230 = vadd.f32 %v45, %v229
    %v231 = vpop.f32.mrf.mxu0
    %232 = vdwg.mxu0
    %233 = vst [vmem:[#allocation2] sm:$0xff] %v171
    %234 = vst [vmem:[#allocation2 + $0x8] sm:$0xff] %v174
    %235 = vst [vmem:[#allocation2 + $0x10] sm:$0xff] %v179
    %236 = vst [vmem:[#allocation2 + $0x18] sm:$0xff] %v182
    %237 = vst [vmem:[#allocation2 + $0x20] sm:$0xff] %v187
    %238 = vst [vmem:[#allocation2 + $0x28] sm:$0xff] %v190
    %239 = vst [vmem:[#allocation2 + $0x30] sm:$0xff] %v195
    %240 = vst [vmem:[#allocation2 + $0x38] sm:$0xff] %v198
    %241 = vst [vmem:[#allocation2 + $0x40] sm:$0xff] %v203
    %242 = vst [vmem:[#allocation2 + $0x48] sm:$0xff] %v206
    %243 = vst [vmem:[#allocation2 + $0x50] sm:$0xff] %v211
    %244 = vst [vmem:[#allocation2 + $0x58] sm:$0xff] %v214
    %245 = vst [vmem:[#allocation2 + $0x60] sm:$0xff] %v219
    %246 = vst [vmem:[#allocation2 + $0x68] sm:$0xff] %v222
    %247 = vst [vmem:[#allocation2 + $0x70] sm:$0xff] %v227
    %248 = vst [vmem:[#allocation2 + $0x78] sm:$0xff] %v230
    // Predicated region
    $region14: #{tpu_custom_call.1} parent=1 // pred_check
      _
    $region15: #{tpu_custom_call.1} parent=1 // pred_check_branch
      %250 = sbr.rel (0) target = $region17
    $region16: #{tpu_custom_call.1} parent=1 // pred_region
      %s252 = ssub.s32 2048, 2048
      %253 = vsyncadd [#allocation3], %s252
      %s254 = sshll.u32 [#allocation2], 4
      %s255 = int_to_ptr.vmem [resolvable:$true] %s254
      %260 = dma.vmem_to_hbm [thread:$0]  %s255, 2048, %s3, [#allocation3], 128, 128, 8
    $region17: #{tpu_custom_call.1} parent=1 // pred_fallthru
      _
    // Predicated region
    $region18: #{tpu_custom_call.1} parent=1 // pred_check
      _
    $region19: #{tpu_custom_call.1} parent=1 // pred_check_branch
      %262 = sbr.rel (0) target = $region21
    $region20: #{tpu_custom_call.1} parent=1 // pred_region
      %263 = dma.done [#allocation3], 2048
    $region21: #{tpu_custom_call.1} parent=1 // pred_fallthru
      _
    %264 = vsyncpa [#allocation3], 1

</llo_original>
